<compile_context>
chip_gen: v6e
topology: v6e:2x2x1
jax: 0.10.0
libtpu: 0.0.40
codegen_flags: <defaults>
</compile_context>

<pallas_src>
import functools

import jax
import jax.numpy as jnp
from jax.experimental import pallas as pl
from jax.experimental.pallas import tpu as pltpu


# ----------------------------- fused kernel ---------------------------------
def _gat_fused_kernel(x_ref, adj_ref, w1_ref, w2_ref, rep1_ref, eyet_ref,
                      bdm_ref, repd_ref, o_ref, *, alpha, n_heads, n_hid,
                      n_class):
    """Whole GAT forward (both layers + log_softmax) in one invocation.

    x_ref    : (N, F)           node features
    adj_ref  : (N, N)           adjacency (0/1)
    w1_ref   : (F, H*D + 2H)    [per-head W | W@a1 | W@a2] folded weights
    w2_ref   : (H*D, C + 2)     [W2 | W2@a2_top | W2@a2_bot]
    rep1_ref : (H, H*N)         rep1[h, h*N + j] = 1           (head broadcast)
    eyet_ref : (N, H*N)         eye_t[j, h*N + j'] = [j == j'] (lane-block scatter)
    bdm_ref  : (H*N, H*D + H)   block-diag mask + head-indicator "ones" columns
    repd_ref : (H, H*D)         repD[h, h*D + d] = 1           (denom broadcast)
    o_ref    : (N, C)           log-probabilities
    """
    H, D, C = n_heads, n_hid, n_class
    N = adj_ref.shape[0]
    HD, HN = H * D, H * N
    f32 = jnp.float32
    neg = f32(-9e15)

    x = x_ref[...]                                   # (N, F)
    adj = adj_ref[...]                               # (N, N)
    rep1 = rep1_ref[...]                             # (H, HN)
    eye_t = eyet_ref[...]                            # (N, HN)
    ones_nn = jnp.ones((N, N), f32)

    # ---- layer 1: all H heads from one lane-dense matmul --------------------
    big1 = jnp.dot(x, w1_ref[...], preferred_element_type=f32)      # (N, HD+2H)
    wh_all = big1[:, :HD]                                           # (N, HD)
    f1_all = big1[:, HD:HD + H]                                     # (N, H)
    f2_all = big1[:, HD + H:HD + 2 * H]                             # (N, H)

    # E_all[i, h*N + j] = f1_all[i, h] + f2_all[j, h]   (heads blocked on lanes)
    f1_term = jnp.dot(f1_all, rep1, preferred_element_type=f32)     # (N, HN)
    f2_scat = jnp.dot(f2_all, rep1, preferred_element_type=f32) * eye_t
    f2_term = jnp.dot(ones_nn, f2_scat, preferred_element_type=f32)  # (N, HN)
    e_all = f1_term + f2_term
    e_all = jnp.where(e_all > 0, e_all, alpha * e_all)              # LeakyReLU

    # adjacency -> additive -9e15 mask, scattered to (N, HN) by exact 0/1 matmul
    adj_t = jnp.dot(adj, eye_t, preferred_element_type=f32)         # (N, HN)
    bias_t = jnp.where(adj_t > 0, f32(0.0), neg)

    # clamp + drop per-row max-subtraction: masked entries still underflow to 0,
    # unmasked exp stays in [e^-30, e^30] (no overflow / zero denominators).
    p_all = jnp.exp(jnp.clip(e_all, -30.0, 30.0) + bias_t)          # (N, HN)

    # ONE block-diagonal K=128 aggregation matmul; the trailing H indicator
    # columns of wbd simultaneously produce the per-head softmax denominators.
    wh_ext = jnp.concatenate([wh_all, jnp.ones((N, H), f32)], axis=1)   # (N, HD+H)
    wbd = jnp.concatenate([wh_ext] * H, axis=0) * bdm_ref[...]          # (HN, HD+H)
    agg_s = jnp.dot(p_all, wbd, preferred_element_type=f32)             # (N, HD+H)
    agg = agg_s[:, :HD]                                                  # (N, HD)
    s_all = agg_s[:, HD:]                                                # (N, H)

    inv1 = pl.reciprocal(s_all, approx=True)
    inv1 = inv1 * (2.0 - s_all * inv1)                  # one Newton step -> ~exact
    inv_rep = jnp.dot(inv1, repd_ref[...], preferred_element_type=f32)   # (N, HD)
    h1 = agg * inv_rep
    out1 = jnp.where(h1 > 0, h1, jnp.exp(jnp.minimum(h1, 0.0)) - 1.0)    # ELU

    # ---- layer 2 (single head) + log_softmax --------------------------------
    big2 = jnp.dot(out1, w2_ref[...], preferred_element_type=f32)    # (N, C+2)
    wh2 = big2[:, :C]                                                # (N, C)
    f1_2 = big2[:, C:C + 1]                                          # (N, 1)
    f2_2 = big2[:, C + 1:C + 2]                                      # (N, 1)

    eye_n = eye_t[:, :N]                                             # (N, N) identity
    f2_row = jnp.dot(ones_nn, f2_2 * eye_n, preferred_element_type=f32)  # rows = f2_2^T
    e2 = f1_2 + f2_row
    e2 = jnp.where(e2 > 0, e2, alpha * e2)
    bias2 = jnp.where(adj > 0, f32(0.0), neg)
    p2 = jnp.exp(jnp.clip(e2, -30.0, 30.0) + bias2)                  # (N, N)

    wh2_ext = jnp.concatenate([wh2, jnp.ones((N, 1), f32)], axis=1)  # (N, C+1)
    agg2 = jnp.dot(p2, wh2_ext, preferred_element_type=f32)          # (N, C+1)
    s2 = agg2[:, C:C + 1]
    inv2 = pl.reciprocal(s2, approx=True)
    inv2 = inv2 * (2.0 - s2 * inv2)
    h2 = agg2[:, :C] * inv2
    out2 = jnp.where(h2 > 0, h2, jnp.exp(jnp.minimum(h2, 0.0)) - 1.0)  # ELU

    m = jnp.max(out2, axis=1, keepdims=True)
    z = out2 - m
    lse = jnp.log(jnp.sum(jnp.exp(z), axis=1, keepdims=True))
    o_ref[...] = (z - lse).astype(o_ref.dtype)


# ------------------------------- wrappers ------------------------------------
def fold_gat_params(w1_stack, a1_stack, w2, a2):
    """One-time parameter prep: fold attention vectors into the weight matmuls.

    w1_stack : (H, F, D)   a1_stack : (H, 2D, 1)
    w2       : (H*D, C)    a2       : (2C, 1)
    """
    H, F, D = w1_stack.shape
    C = w2.shape[1]
    w_all = jnp.transpose(w1_stack, (1, 0, 2)).reshape(F, H * D)      # (F, H*D)
    wa1 = jnp.einsum("hfd,hd->fh", w1_stack, a1_stack[:, :D, 0])      # (F, H)
    wa2 = jnp.einsum("hfd,hd->fh", w1_stack, a1_stack[:, D:, 0])      # (F, H)
    w1_big = jnp.concatenate([w_all, wa1, wa2], axis=1)               # (F, H*D+2H)
    w2_big = jnp.concatenate([w2, w2 @ a2[:C], w2 @ a2[C:]], axis=1)  # (H*D, C+2)
    return w1_big, w2_big


def make_gat_constants(n_nodes, n_heads, n_hid):
    """0/1 constant masks used for the lane-blocked head layout (built once)."""
    N, H, D = n_nodes, n_heads, n_hid
    col_hn = jnp.arange(H * N)
    rep1 = (col_hn[None, :] // N == jnp.arange(H)[:, None]).astype(jnp.float32)
    eye_t = (col_hn[None, :] % N == jnp.arange(N)[:, None]).astype(jnp.float32)
    row_head = jnp.arange(H * N)[:, None] // N
    bd_feat = (row_head == (jnp.arange(H * D)[None, :] // D)).astype(jnp.float32)
    bd_ind = (row_head == jnp.arange(H)[None, :]).astype(jnp.float32)
    bd_mask = jnp.concatenate([bd_feat, bd_ind], axis=1)               # (H*N, H*D+H)
    rep_d = (jnp.arange(H * D)[None, :] // D
             == jnp.arange(H)[:, None]).astype(jnp.float32)            # (H, H*D)
    return rep1, eye_t, bd_mask, rep_d


def gat_forward(x, adj, w1_big, w2_big, rep1, eye_t, bd_mask, rep_d, *,
                alpha, n_heads, n_hid, n_class):
    """Full GAT forward (eval mode: dropouts are identity). Single pallas_call."""
    N = x.shape[0]
    kernel = functools.partial(_gat_fused_kernel, alpha=alpha, n_heads=n_heads,
                               n_hid=n_hid, n_class=n_class)
    vmem = pl.BlockSpec(memory_space=pltpu.MemorySpace.VMEM)
    return pl.pallas_call(
        kernel,
        out_shape=jax.ShapeDtypeStruct((N, n_class), jnp.float32),
        in_specs=[vmem] * 8,
        out_specs=vmem,
    )(x, adj, w1_big, w2_big, rep1, eye_t, bd_mask, rep_d)


# ------------------------- pure-JAX reference -------------------------------
def _ref_layer(x, adj, w, a, alpha):
    hp = jax.lax.Precision.HIGHEST
    wh = jnp.dot(x, w, precision=hp)
    D = w.shape[1]
    f1 = jnp.dot(wh, a[:D], precision=hp)
    f2 = jnp.dot(wh, a[D:], precision=hp)
    e = f1 + f2.T
    e = jnp.where(e > 0, e, alpha * e)
    attn = jnp.where(adj > 0, e, -9e15)
    attn = jax.nn.softmax(attn, axis=1)
    h = jnp.dot(attn, wh, precision=hp)
    return jnp.where(h > 0, h, jnp.expm1(jnp.minimum(h, 0.0)))


def _ref_gat(x, adj, params, alpha):
    outs = [_ref_layer(x, adj, params["w1"][h], params["a1"][h], alpha)
            for h in range(params["w1"].shape[0])]
    out1 = jnp.concatenate(outs, axis=1)
    out2 = _ref_layer(out1, adj, params["w2"], params["a2"], alpha)
    return jax.nn.log_softmax(out2, axis=1)


# --------------------------------- main --------------------------------------
def _xavier_normal(key, shape):
    fan_in, fan_out = shape[-2], shape[-1]
    std = (2.0 / (fan_in + fan_out)) ** 0.5
    return std * jax.random.normal(key, shape, jnp.float32)


if __name__ == "__main__":
    # Small shapes consistent with the module:
    # n_features=64, n_hid=8, n_heads=8, n_class=7, alpha=0.2, N=16 nodes.
    N, F, D, H, C = 16, 64, 8, 8, 7
    alpha = 0.2

    key = jax.random.PRNGKey(0)
    k_x, k_adj, k_w1, k_a1, k_w2, k_a2 = jax.random.split(key, 6)

    x = jax.random.normal(k_x, (N, F), jnp.float32)
    adj = (jax.random.uniform(k_adj, (N, N)) > 0.6).astype(jnp.float32)
    adj = jnp.maximum(adj, jnp.eye(N, dtype=jnp.float32))  # self-loops

    params = {
        "w1": _xavier_normal(k_w1, (H, F, D)),        # gat1 weights (per head)
        "a1": _xavier_normal(k_a1, (H, 2 * D, 1)),    # gat1 attention vectors
        "w2": _xavier_normal(k_w2, (H * D, C)),       # gat2 weight
        "a2": _xavier_normal(k_a2, (2 * C, 1)),       # gat2 attention vector
    }

    # One-time folding of attention vectors + one-time 0/1 layout constants.
    w1_big, w2_big = fold_gat_params(params["w1"], params["a1"],
                                     params["w2"], params["a2"])
    rep1, eye_t, bd_mask, rep_d = make_gat_constants(N, H, D)

    fwd = jax.jit(functools.partial(gat_forward, alpha=alpha, n_heads=H,
                                    n_hid=D, n_class=C))
    out = jax.block_until_ready(
        fwd(x, adj, w1_big, w2_big, rep1, eye_t, bd_mask, rep_d))

    ref = _ref_gat(x, adj, params, alpha)
    assert out.shape == (N, C), out.shape
    assert bool(jnp.all(jnp.isfinite(out)))
    assert jnp.allclose(out, ref, atol=2e-3, rtol=2e-3), (
        float(jnp.max(jnp.abs(out - ref))))

    print("KERNEL_OK")
</pallas_src>

<mosaic_0001>
module attributes {stable_mosaic.version = 11 : i64} {
  func.func @_gat_fused_kernel(%arg0: memref<16x64xf32, #tpu.memory_space<vmem>>, %arg1: memref<16x16xf32, #tpu.memory_space<vmem>>, %arg2: memref<64x80xf32, #tpu.memory_space<vmem>>, %arg3: memref<64x9xf32, #tpu.memory_space<vmem>>, %arg4: memref<8x128xf32, #tpu.memory_space<vmem>>, %arg5: memref<16x128xf32, #tpu.memory_space<vmem>>, %arg6: memref<128x72xf32, #tpu.memory_space<vmem>>, %arg7: memref<8x64xf32, #tpu.memory_space<vmem>>, %arg8: memref<16x7xf32, #tpu.memory_space<vmem>>) attributes {dimension_semantics = [], scalar_prefetch = 0 : i64, scratch_operands = 0 : i64, tpu.core_type = #tpu.core_type<tc>} {
    %c0 = arith.constant 0 : index
    %c0_0 = arith.constant 0 : index
    %0 = vector.load %arg0[%c0, %c0_0] : memref<16x64xf32, #tpu.memory_space<vmem>>, vector<16x64xf32>
    %c0_1 = arith.constant 0 : index
    %c0_2 = arith.constant 0 : index
    %1 = vector.load %arg1[%c0_1, %c0_2] : memref<16x16xf32, #tpu.memory_space<vmem>>, vector<16x16xf32>
    %c0_3 = arith.constant 0 : index
    %c0_4 = arith.constant 0 : index
    %2 = vector.load %arg4[%c0_3, %c0_4] : memref<8x128xf32, #tpu.memory_space<vmem>>, vector<8x128xf32>
    %c0_5 = arith.constant 0 : index
    %c0_6 = arith.constant 0 : index
    %3 = vector.load %arg5[%c0_5, %c0_6] : memref<16x128xf32, #tpu.memory_space<vmem>>, vector<16x128xf32>
    %cst = arith.constant 1.000000e+00 : f32
    %4 = vector.broadcast %cst : f32 to vector<16x16xf32>
    %c0_7 = arith.constant 0 : index
    %c0_8 = arith.constant 0 : index
    %5 = vector.load %arg2[%c0_7, %c0_8] : memref<64x80xf32, #tpu.memory_space<vmem>>, vector<64x80xf32>
    %cst_9 = arith.constant dense<0.000000e+00> : vector<16x80xf32>
    %6 = tpu.matmul %0, %5, %cst_9 {dimension_numbers = #tpu.dot_dimension_numbers<[1], [0], [0], [1], [0, 0, 1, 1], [], []>} : vector<16x64xf32>, vector<64x80xf32>, vector<16x80xf32> -> vector<16x80xf32>
    %7 = vector.extract_strided_slice %6 {offsets = [0, 0], sizes = [16, 64], strides = [1, 1]} : vector<16x80xf32> to vector<16x64xf32>
    %8 = vector.extract_strided_slice %6 {offsets = [0, 64], sizes = [16, 8], strides = [1, 1]} : vector<16x80xf32> to vector<16x8xf32>
    %9 = vector.extract_strided_slice %6 {offsets = [0, 72], sizes = [16, 8], strides = [1, 1]} : vector<16x80xf32> to vector<16x8xf32>
    %cst_10 = arith.constant dense<0.000000e+00> : vector<16x128xf32>
    %10 = tpu.matmul %8, %2, %cst_10 {dimension_numbers = #tpu.dot_dimension_numbers<[1], [0], [0], [1], [0, 0, 1, 1], [], []>} : vector<16x8xf32>, vector<8x128xf32>, vector<16x128xf32> -> vector<16x128xf32>
    %cst_11 = arith.constant dense<0.000000e+00> : vector<16x128xf32>
    %11 = tpu.matmul %9, %2, %cst_11 {dimension_numbers = #tpu.dot_dimension_numbers<[1], [0], [0], [1], [0, 0, 1, 1], [], []>} : vector<16x8xf32>, vector<8x128xf32>, vector<16x128xf32> -> vector<16x128xf32>
    %12 = arith.mulf %11, %3 : vector<16x128xf32>
    %cst_12 = arith.constant dense<0.000000e+00> : vector<16x128xf32>
    %13 = tpu.matmul %4, %12, %cst_12 {dimension_numbers = #tpu.dot_dimension_numbers<[1], [0], [0], [1], [0, 0, 1, 1], [], []>} : vector<16x16xf32>, vector<16x128xf32>, vector<16x128xf32> -> vector<16x128xf32>
    %14 = arith.addf %10, %13 : vector<16x128xf32>
    %cst_13 = arith.constant 0.000000e+00 : f32
    %15 = vector.broadcast %cst_13 : f32 to vector<16x128xf32>
    %16 = arith.cmpf ogt, %14, %15 : vector<16x128xf32>
    %cst_14 = arith.constant 2.000000e-01 : f32
    %17 = vector.broadcast %cst_14 : f32 to vector<16x128xf32>
    %18 = arith.mulf %17, %14 : vector<16x128xf32>
    %19 = arith.select %16, %14, %18 : vector<16x128xi1>, vector<16x128xf32>
    %cst_15 = arith.constant dense<0.000000e+00> : vector<16x128xf32>
    %20 = tpu.matmul %1, %3, %cst_15 {dimension_numbers = #tpu.dot_dimension_numbers<[1], [0], [0], [1], [0, 0, 1, 1], [], []>} : vector<16x16xf32>, vector<16x128xf32>, vector<16x128xf32> -> vector<16x128xf32>
    %cst_16 = arith.constant 0.000000e+00 : f32
    %21 = vector.broadcast %cst_16 : f32 to vector<16x128xf32>
    %22 = arith.cmpf ogt, %20, %21 : vector<16x128xf32>
    %cst_17 = arith.constant 0.000000e+00 : f32
    %cst_18 = arith.constant -9.000000e+15 : f32
    %23 = vector.broadcast %cst_17 : f32 to vector<16x128xf32>
    %24 = vector.broadcast %cst_18 : f32 to vector<16x128xf32>
    %25 = arith.select %22, %23, %24 : vector<16x128xi1>, vector<16x128xf32>
    %cst_19 = arith.constant -3.000000e+01 : f32
    %cst_20 = arith.constant 3.000000e+01 : f32
    %26 = vector.broadcast %cst_19 : f32 to vector<16x128xf32>
    %27 = arith.maximumf %26, %19 : vector<16x128xf32>
    %28 = vector.broadcast %cst_20 : f32 to vector<16x128xf32>
    %29 = arith.minimumf %28, %27 : vector<16x128xf32>
    %30 = arith.addf %29, %25 : vector<16x128xf32>
    %31 = math.exp %30 : vector<16x128xf32>
    %cst_21 = arith.constant 1.000000e+00 : f32
    %32 = vector.broadcast %cst_21 : f32 to vector<16x8xf32>
    %33 = tpu.concatenate %7, %32 in 1 : vector<16x64xf32>, vector<16x8xf32> -> vector<16x72xf32>
    %34 = tpu.concatenate %33, %33, %33, %33, %33, %33, %33, %33 in 0 : vector<16x72xf32>, vector<16x72xf32>, vector<16x72xf32>, vector<16x72xf32>, vector<16x72xf32>, vector<16x72xf32>, vector<16x72xf32>, vector<16x72xf32> -> vector<128x72xf32>
    %c0_22 = arith.constant 0 : index
    %c0_23 = arith.constant 0 : index
    %35 = vector.load %arg6[%c0_22, %c0_23] : memref<128x72xf32, #tpu.memory_space<vmem>>, vector<128x72xf32>
    %36 = arith.mulf %34, %35 : vector<128x72xf32>
    %cst_24 = arith.constant dense<0.000000e+00> : vector<16x72xf32>
    %37 = tpu.matmul %31, %36, %cst_24 {dimension_numbers = #tpu.dot_dimension_numbers<[1], [0], [0], [1], [0, 0, 1, 1], [], []>} : vector<16x128xf32>, vector<128x72xf32>, vector<16x72xf32> -> vector<16x72xf32>
    %38 = vector.extract_strided_slice %37 {offsets = [0, 0], sizes = [16, 64], strides = [1, 1]} : vector<16x72xf32> to vector<16x64xf32>
    %39 = vector.extract_strided_slice %37 {offsets = [0, 64], sizes = [16, 8], strides = [1, 1]} : vector<16x72xf32> to vector<16x8xf32>
    %40 = tpu.reciprocal %39 {approx = true} : vector<16x8xf32> -> vector<16x8xf32>
    %41 = arith.mulf %39, %40 : vector<16x8xf32>
    %cst_25 = arith.constant 2.000000e+00 : f32
    %42 = vector.broadcast %cst_25 : f32 to vector<16x8xf32>
    %43 = arith.subf %42, %41 : vector<16x8xf32>
    %44 = arith.mulf %40, %43 : vector<16x8xf32>
    %c0_26 = arith.constant 0 : index
    %c0_27 = arith.constant 0 : index
    %45 = vector.load %arg7[%c0_26, %c0_27] : memref<8x64xf32, #tpu.memory_space<vmem>>, vector<8x64xf32>
    %cst_28 = arith.constant dense<0.000000e+00> : vector<16x64xf32>
    %46 = tpu.matmul %44, %45, %cst_28 {dimension_numbers = #tpu.dot_dimension_numbers<[1], [0], [0], [1], [0, 0, 1, 1], [], []>} : vector<16x8xf32>, vector<8x64xf32>, vector<16x64xf32> -> vector<16x64xf32>
    %47 = arith.mulf %38, %46 : vector<16x64xf32>
    %cst_29 = arith.constant 0.000000e+00 : f32
    %48 = vector.broadcast %cst_29 : f32 to vector<16x64xf32>
    %49 = arith.cmpf ogt, %47, %48 : vector<16x64xf32>
    %cst_30 = arith.constant 0.000000e+00 : f32
    %50 = vector.broadcast %cst_30 : f32 to vector<16x64xf32>
    %51 = arith.minimumf %47, %50 : vector<16x64xf32>
    %52 = math.exp %51 : vector<16x64xf32>
    %cst_31 = arith.constant 1.000000e+00 : f32
    %53 = vector.broadcast %cst_31 : f32 to vector<16x64xf32>
    %54 = arith.subf %52, %53 : vector<16x64xf32>
    %55 = arith.select %49, %47, %54 : vector<16x64xi1>, vector<16x64xf32>
    %c0_32 = arith.constant 0 : index
    %c0_33 = arith.constant 0 : index
    %56 = vector.load %arg3[%c0_32, %c0_33] : memref<64x9xf32, #tpu.memory_space<vmem>>, vector<64x9xf32>
    %cst_34 = arith.constant dense<0.000000e+00> : vector<16x9xf32>
    %57 = tpu.matmul %55, %56, %cst_34 {dimension_numbers = #tpu.dot_dimension_numbers<[1], [0], [0], [1], [0, 0, 1, 1], [], []>} : vector<16x64xf32>, vector<64x9xf32>, vector<16x9xf32> -> vector<16x9xf32>
    %58 = vector.extract_strided_slice %57 {offsets = [0, 0], sizes = [16, 7], strides = [1, 1]} : vector<16x9xf32> to vector<16x7xf32>
    %59 = vector.extract_strided_slice %57 {offsets = [0, 7], sizes = [16, 1], strides = [1, 1]} : vector<16x9xf32> to vector<16x1xf32>
    %60 = vector.extract_strided_slice %57 {offsets = [0, 8], sizes = [16, 1], strides = [1, 1]} : vector<16x9xf32> to vector<16x1xf32>
    %61 = vector.extract_strided_slice %3 {offsets = [0, 0], sizes = [16, 16], strides = [1, 1]} : vector<16x128xf32> to vector<16x16xf32>
    %62 = vector.broadcast %60 : vector<16x1xf32> to vector<16x16xf32>
    %63 = arith.mulf %62, %61 : vector<16x16xf32>
    %cst_35 = arith.constant dense<0.000000e+00> : vector<16x16xf32>
    %64 = tpu.matmul %4, %63, %cst_35 {dimension_numbers = #tpu.dot_dimension_numbers<[1], [0], [0], [1], [0, 0, 1, 1], [], []>} : vector<16x16xf32>, vector<16x16xf32>, vector<16x16xf32> -> vector<16x16xf32>
    %65 = vector.broadcast %59 : vector<16x1xf32> to vector<16x16xf32>
    %66 = arith.addf %65, %64 : vector<16x16xf32>
    %cst_36 = arith.constant 0.000000e+00 : f32
    %67 = vector.broadcast %cst_36 : f32 to vector<16x16xf32>
    %68 = arith.cmpf ogt, %66, %67 : vector<16x16xf32>
    %cst_37 = arith.constant 2.000000e-01 : f32
    %69 = vector.broadcast %cst_37 : f32 to vector<16x16xf32>
    %70 = arith.mulf %69, %66 : vector<16x16xf32>
    %71 = arith.select %68, %66, %70 : vector<16x16xi1>, vector<16x16xf32>
    %cst_38 = arith.constant 0.000000e+00 : f32
    %72 = vector.broadcast %cst_38 : f32 to vector<16x16xf32>
    %73 = arith.cmpf ogt, %1, %72 : vector<16x16xf32>
    %cst_39 = arith.constant 0.000000e+00 : f32
    %cst_40 = arith.constant -9.000000e+15 : f32
    %74 = vector.broadcast %cst_39 : f32 to vector<16x16xf32>
    %75 = vector.broadcast %cst_40 : f32 to vector<16x16xf32>
    %76 = arith.select %73, %74, %75 : vector<16x16xi1>, vector<16x16xf32>
    %cst_41 = arith.constant -3.000000e+01 : f32
    %cst_42 = arith.constant 3.000000e+01 : f32
    %77 = vector.broadcast %cst_41 : f32 to vector<16x16xf32>
    %78 = arith.maximumf %77, %71 : vector<16x16xf32>
    %79 = vector.broadcast %cst_42 : f32 to vector<16x16xf32>
    %80 = arith.minimumf %79, %78 : vector<16x16xf32>
    %81 = arith.addf %80, %76 : vector<16x16xf32>
    %82 = math.exp %81 : vector<16x16xf32>
    %cst_43 = arith.constant 1.000000e+00 : f32
    %83 = vector.broadcast %cst_43 : f32 to vector<16x1xf32>
    %84 = tpu.concatenate %58, %83 in 1 : vector<16x7xf32>, vector<16x1xf32> -> vector<16x8xf32>
    %cst_44 = arith.constant dense<0.000000e+00> : vector<16x8xf32>
    %85 = tpu.matmul %82, %84, %cst_44 {dimension_numbers = #tpu.dot_dimension_numbers<[1], [0], [0], [1], [0, 0, 1, 1], [], []>} : vector<16x16xf32>, vector<16x8xf32>, vector<16x8xf32> -> vector<16x8xf32>
    %86 = vector.extract_strided_slice %85 {offsets = [0, 7], sizes = [16, 1], strides = [1, 1]} : vector<16x8xf32> to vector<16x1xf32>
    %87 = tpu.reciprocal %86 {approx = true} : vector<16x1xf32> -> vector<16x1xf32>
    %88 = arith.mulf %86, %87 : vector<16x1xf32>
    %cst_45 = arith.constant 2.000000e+00 : f32
    %89 = vector.broadcast %cst_45 : f32 to vector<16x1xf32>
    %90 = arith.subf %89, %88 : vector<16x1xf32>
    %91 = arith.mulf %87, %90 : vector<16x1xf32>
    %92 = vector.extract_strided_slice %85 {offsets = [0, 0], sizes = [16, 7], strides = [1, 1]} : vector<16x8xf32> to vector<16x7xf32>
    %93 = vector.broadcast %91 : vector<16x1xf32> to vector<16x7xf32>
    %94 = arith.mulf %92, %93 : vector<16x7xf32>
    %cst_46 = arith.constant 0.000000e+00 : f32
    %95 = vector.broadcast %cst_46 : f32 to vector<16x7xf32>
    %96 = arith.cmpf ogt, %94, %95 : vector<16x7xf32>
    %cst_47 = arith.constant 0.000000e+00 : f32
    %97 = vector.broadcast %cst_47 : f32 to vector<16x7xf32>
    %98 = arith.minimumf %94, %97 : vector<16x7xf32>
    %99 = math.exp %98 : vector<16x7xf32>
    %cst_48 = arith.constant 1.000000e+00 : f32
    %100 = vector.broadcast %cst_48 : f32 to vector<16x7xf32>
    %101 = arith.subf %99, %100 : vector<16x7xf32>
    %102 = arith.select %96, %94, %101 : vector<16x7xi1>, vector<16x7xf32>
    %cst_49 = arith.constant dense<0xFF800000> : vector<16xf32>
    %103 = vector.multi_reduction <maximumf>, %102, %cst_49 [1] : vector<16x7xf32> to vector<16xf32>
    %104 = vector.shape_cast %103 : vector<16xf32> to vector<16x1xf32>
    %105 = vector.broadcast %104 : vector<16x1xf32> to vector<16x7xf32>
    %106 = arith.subf %102, %105 : vector<16x7xf32>
    %107 = math.exp %106 : vector<16x7xf32>
    %cst_50 = arith.constant dense<0.000000e+00> : vector<16xf32>
    %108 = vector.multi_reduction <add>, %107, %cst_50 [1] : vector<16x7xf32> to vector<16xf32>
    %109 = vector.shape_cast %108 : vector<16xf32> to vector<16x1xf32>
    %110 = math.log %109 : vector<16x1xf32>
    %111 = vector.broadcast %110 : vector<16x1xf32> to vector<16x7xf32>
    %112 = arith.subf %106, %111 : vector<16x7xf32>
    %c0_51 = arith.constant 0 : index
    %c0_52 = arith.constant 0 : index
    %113 = vector.load %arg8[%c0_51, %c0_52] : memref<16x7xf32, #tpu.memory_space<vmem>>, vector<16x7xf32>
    tpu.vector_store %arg8[%c0_51, %c0_52], %112 {strides = array<i32>} : memref<16x7xf32, #tpu.memory_space<vmem>>, vector<16x7xf32>,
    return
  }
}

</mosaic_0001>

<llo_original>
// kernel: gat_forward.1
$region0: #{gat_forward.1}
  #allocation0 [shape = 'u32[]', space=smem, size = 0x4, offset = 0x4, fixed_abs, tag = 'smem constant byte address 0x4 - core index']
  #allocation1 [shape = 'u32[144,128]{1,0:T(1,128)}', space=vmem, size = 0x12000, scoped, tag = 'internal scratch']
  %s0 = inlined_call_operand.vmem [shape: f32[16,64], index: 0, kind: input, shape index: {}]
  %s1 = inlined_call_operand.vmem [shape: f32[16,16], index: 1, kind: input, shape index: {}]
  %s2 = inlined_call_operand.vmem [shape: f32[64,80], index: 2, kind: input, shape index: {}]
  %s3 = inlined_call_operand.vmem [shape: f32[64,9], index: 3, kind: input, shape index: {}]
  %s4 = inlined_call_operand.vmem [shape: f32[8,128], index: 4, kind: input, shape index: {}]
  %s5 = inlined_call_operand.vmem [shape: f32[16,128], index: 5, kind: input, shape index: {}]
  %s6 = inlined_call_operand.vmem [shape: f32[128,72], index: 6, kind: input, shape index: {}]
  %s7 = inlined_call_operand.vmem [shape: f32[8,64], index: 7, kind: input, shape index: {}]
  %s8 = inlined_call_operand.vmem [shape: f32[16,7], index: 8, kind: output, shape index: {}]
  %s9 = sld [smem:[#allocation0]]
  $region42: #{gat_forward.1} parent=0
    _
  %s11 = ssub.s32 1, %s9
  %s12 = scalar_select 0, %s11, %s9
  // Predicated region
  $region2: #{gat_forward.1} parent=0 // pred_check
    _
  $region3: #{gat_forward.1} parent=0 // pred_check_branch
    %14 = sbr.rel (0) target = $region5
  $region4: #{gat_forward.1} parent=0 // pred_region
    _
  $region5: #{gat_forward.1} parent=0 // pred_fallthru
    _
  // Predicated region
  $region6: #{gat_forward.1} parent=0 // pred_check
    _
  $region7: #{gat_forward.1} parent=0 // pred_check_branch
    %16 = sbr.rel (0) target = $region9
  $region8: #{gat_forward.1} parent=0 // pred_region
    _
  $region9: #{gat_forward.1} parent=0 // pred_fallthru
    _
  // Predicated region
  $region10: #{gat_forward.1} parent=0 // pred_check
    _
  $region11: #{gat_forward.1} parent=0 // pred_check_branch
    %18 = sbr.rel (0) target = $region13
  $region12: #{gat_forward.1} parent=0 // pred_region
    _
  $region13: #{gat_forward.1} parent=0 // pred_fallthru
    _
  // Predicated region
  $region14: #{gat_forward.1} parent=0 // pred_check
    _
  $region15: #{gat_forward.1} parent=0 // pred_check_branch
    %20 = sbr.rel (0) target = $region17
  $region16: #{gat_forward.1} parent=0 // pred_region
    _
  $region17: #{gat_forward.1} parent=0 // pred_fallthru
    _
  // Predicated region
  $region18: #{gat_forward.1} parent=0 // pred_check
    _
  $region19: #{gat_forward.1} parent=0 // pred_check_branch
    %22 = sbr.rel (0) target = $region21
  $region20: #{gat_forward.1} parent=0 // pred_region
    _
  $region21: #{gat_forward.1} parent=0 // pred_fallthru
    _
  // Predicated region
  $region22: #{gat_forward.1} parent=0 // pred_check
    _
  $region23: #{gat_forward.1} parent=0 // pred_check_branch
    %24 = sbr.rel (0) target = $region25
  $region24: #{gat_forward.1} parent=0 // pred_region
    _
  $region25: #{gat_forward.1} parent=0 // pred_fallthru
    _
  // Predicated region
  $region26: #{gat_forward.1} parent=0 // pred_check
    _
  $region27: #{gat_forward.1} parent=0 // pred_check_branch
    %26 = sbr.rel (0) target = $region29
  $region28: #{gat_forward.1} parent=0 // pred_region
    _
  $region29: #{gat_forward.1} parent=0 // pred_fallthru
    _
  // Predicated region
  $region30: #{gat_forward.1} parent=0 // pred_check
    _
  $region31: #{gat_forward.1} parent=0 // pred_check_branch
    %28 = sbr.rel (0) target = $region33
  $region32: #{gat_forward.1} parent=0 // pred_region
    _
  $region33: #{gat_forward.1} parent=0 // pred_fallthru
    _
  %v29 = vld [vmem:[%s0] sm:$0xff]
  %v30 = vld [vmem:[%s0 + $0x8] sm:$0xff]
  %v31 = vld [vmem:[%s1] sm:$0xff]
  %v32 = vld [vmem:[%s1 + $0x8] sm:$0xff]
  %v33 = vld [vmem:[%s4] sm:$0xff]
  %v34 = vld [vmem:[%s5] sm:$0xff]
  %v35 = vld [vmem:[%s5 + $0x8] sm:$0xff]
  %v36 = vld [vmem:[%s2] sm:$0xff]
  %v37 = vld [vmem:[%s2 + $0x8] sm:$0xff]
  %v38 = vld [vmem:[%s2 + $0x10] sm:$0xff]
  %v39 = vld [vmem:[%s2 + $0x18] sm:$0xff]
  %v40 = vld [vmem:[%s2 + $0x20] sm:$0xff]
  %v41 = vld [vmem:[%s2 + $0x28] sm:$0xff]
  %v42 = vld [vmem:[%s2 + $0x30] sm:$0xff]
  %v43 = vld [vmem:[%s2 + $0x38] sm:$0xff]
  %vm44 = vcmask 523264
  %v46 = vsel %vm44, %v29, 0
  %v49 = vsel %vm44, %v30, 0
  %51 = vmatprep.subr.mxu0 0.0
  %52 = vmatpush1.msra.mxu0 0.0
  %53 = vmatprep.subr.mxu0 0.0
  %54 = vmatpush1.msra.mxu0 0.0
  %55 = vmatprep.subr.mxu0 0.0
  %56 = vmatpush1.msra.mxu0 0.0
  %57 = vmatprep.subr.mxu0 0.0
  %58 = vmatpush1.msra.mxu0 0.0
  %59 = vmatprep.subr.mxu0 0.0
  %60 = vmatpush1.msra.mxu0 0.0
  %61 = vmatprep.subr.mxu0 0.0
  %62 = vmatpush1.msra.mxu0 0.0
  %63 = vmatprep.subr.mxu0 0.0
  %64 = vmatpush1.msra.mxu0 0.0
  %65 = vmatprep.subr.mxu0 0.0
  %66 = vmatpush1.msra.mxu0 0.0
  %67 = vmatprep.subr.mxu0 0.0
  %68 = vmatpush1.msra.mxu0 %v43
  %69 = vmatprep.subr.mxu0 0.0
  %70 = vmatpush1.msra.mxu0 %v42
  %71 = vmatprep.subr.mxu0 0.0
  %72 = vmatpush1.msra.mxu0 %v41
  %73 = vmatprep.subr.mxu0 0.0
  %74 = vmatpush1.msra.mxu0 %v40
  %75 = vmatprep.subr.mxu0 0.0
  %76 = vmatpush1.msra.mxu0 %v39
  %77 = vmatprep.subr.mxu0 0.0
  %78 = vmatpush1.msra.mxu0 %v38
  %79 = vmatprep.subr.mxu0 0.0
  %80 = vmatpush1.msra.mxu0 %v37
  %81 = vmatprep.subr.mxu0 0.0
  %82 = vmatpush1.msra.mxu0 %v36
  %83 = vmatprep.subr.mxu0 0.0
  %84 = vmatpush2.msra.mxu0 0.0
  %85 = vmatprep.subr.mxu0 0.0
  %86 = vmatpush2.msra.mxu0 0.0
  %87 = vmatprep.subr.mxu0 0.0
  %88 = vmatpush2.msra.mxu0 0.0
  %89 = vmatprep.subr.mxu0 0.0
  %90 = vmatpush2.msra.mxu0 0.0
  %91 = vmatprep.subr.mxu0 0.0
  %92 = vmatpush2.msra.mxu0 0.0
  %93 = vmatprep.subr.mxu0 0.0
  %94 = vmatpush2.msra.mxu0 0.0
  %95 = vmatprep.subr.mxu0 0.0
  %96 = vmatpush2.msra.mxu0 0.0
  %97 = vmatprep.subr.mxu0 0.0
  %98 = vmatpush2.msra.mxu0 0.0
  %99 = vmatprep.subr.mxu0 0.0
  %100 = vmatpush2.msra.mxu0 0.0
  %101 = vmatprep.subr.mxu0 0.0
  %102 = vmatpush2.msra.mxu0 0.0
  %103 = vmatprep.subr.mxu0 0.0
  %104 = vmatpush2.msra.mxu0 0.0
  %105 = vmatprep.subr.mxu0 0.0
  %106 = vmatpush2.msra.mxu0 0.0
  %107 = vmatprep.subr.mxu0 0.0
  %108 = vmatpush2.msra.mxu0 0.0
  %109 = vmatprep.subr.mxu0 0.0
  %110 = vmatpush2.msra.mxu0 0.0
  %111 = vmatprep.subr.mxu0 0.0
  %112 = vmatpush2.msra.mxu0 0.0
  %113 = vmatprep.subr.mxu0 0.0
  %114 = vmatpush2.msra.mxu0 0.0
  %115 = vmatprep.mubr.f32.mxu0 0.0
  %116 = vmatmul.mubr.f32.gmra.mxu0 %v46
  %v117 = vpop.f32.mrf.mxu0
  %v118 = vadd.f32 0.0, %v117
  %v119 = vpop.f32.mrf.mxu0
  %120 = vmatprep.mubr.f32.mxu0 0.0
  %121 = vmatmul.mubr.f32.gmra.mxu0 %v49
  %v122 = vpop.f32.mrf.mxu0
  %v123 = vadd.f32 0.0, %v122
  %v124 = vpop.f32.mrf.mxu0
  %125 = vdwg.mxu0
  %128 = vrot.lane.b32.xlu0 %v118, 56
  %v129 = vpop.permute.xlu0 %128
  %130 = vrot.lane.b32.xlu0 %v123, 56
  %v131 = vpop.permute.xlu0 %130
  %vm132 = vcmask 64512
  %v133 = vsel %vm132, %v129, 0
  %v135 = vsel %vm132, %v131, 0
  %137 = vmatprep.subr.mxu0 0.0
  %138 = vmatpush1.msra.mxu0 0.0
  %139 = vmatprep.subr.mxu0 0.0
  %140 = vmatpush1.msra.mxu0 0.0
  %141 = vmatprep.subr.mxu0 0.0
  %142 = vmatpush1.msra.mxu0 0.0
  %143 = vmatprep.subr.mxu0 0.0
  %144 = vmatpush1.msra.mxu0 0.0
  %145 = vmatprep.subr.mxu0 0.0
  %146 = vmatpush1.msra.mxu0 0.0
  %147 = vmatprep.subr.mxu0 0.0
  %148 = vmatpush1.msra.mxu0 0.0
  %149 = vmatprep.subr.mxu0 0.0
  %150 = vmatpush1.msra.mxu0 0.0
  %151 = vmatprep.subr.mxu0 0.0
  %152 = vmatpush1.msra.mxu0 0.0
  %153 = vmatprep.subr.mxu0 0.0
  %154 = vmatpush1.msra.mxu0 0.0
  %155 = vmatprep.subr.mxu0 0.0
  %156 = vmatpush1.msra.mxu0 0.0
  %157 = vmatprep.subr.mxu0 0.0
  %158 = vmatpush1.msra.mxu0 0.0
  %159 = vmatprep.subr.mxu0 0.0
  %160 = vmatpush1.msra.mxu0 0.0
  %161 = vmatprep.subr.mxu0 0.0
  %162 = vmatpush1.msra.mxu0 0.0
  %163 = vmatprep.subr.mxu0 0.0
  %164 = vmatpush1.msra.mxu0 0.0
  %165 = vmatprep.subr.mxu0 0.0
  %166 = vmatpush1.msra.mxu0 0.0
  %167 = vmatprep.subr.mxu0 0.0
  %168 = vmatpush1.msra.mxu0 %v33
  %169 = vmatprep.subr.mxu0 0.0
  %170 = vmatpush2.msra.mxu0 0.0
  %171 = vmatprep.subr.mxu0 0.0
  %172 = vmatpush2.msra.mxu0 0.0
  %173 = vmatprep.subr.mxu0 0.0
  %174 = vmatpush2.msra.mxu0 0.0
  %175 = vmatprep.subr.mxu0 0.0
  %176 = vmatpush2.msra.mxu0 0.0
  %177 = vmatprep.subr.mxu0 0.0
  %178 = vmatpush2.msra.mxu0 0.0
  %179 = vmatprep.subr.mxu0 0.0
  %180 = vmatpush2.msra.mxu0 0.0
  %181 = vmatprep.subr.mxu0 0.0
  %182 = vmatpush2.msra.mxu0 0.0
  %183 = vmatprep.subr.mxu0 0.0
  %184 = vmatpush2.msra.mxu0 0.0
  %185 = vmatprep.subr.mxu0 0.0
  %186 = vmatpush2.msra.mxu0 0.0
  %187 = vmatprep.subr.mxu0 0.0
  %188 = vmatpush2.msra.mxu0 0.0
  %189 = vmatprep.subr.mxu0 0.0
  %190 = vmatpush2.msra.mxu0 0.0
  %191 = vmatprep.subr.mxu0 0.0
  %192 = vmatpush2.msra.mxu0 0.0
  %193 = vmatprep.subr.mxu0 0.0
  %194 = vmatpush2.msra.mxu0 0.0
  %195 = vmatprep.subr.mxu0 0.0
  %196 = vmatpush2.msra.mxu0 0.0
  %197 = vmatprep.subr.mxu0 0.0
  %198 = vmatpush2.msra.mxu0 0.0
  %199 = vmatprep.subr.mxu0 0.0
  %200 = vmatpush2.msra.mxu0 0.0
  %201 = vmatprep.mubr.f32.mxu0 0.0
  %202 = vmatmul.mubr.f32.gmra.mxu0 %v133
  %v203 = vpop.f32.mrf.mxu0
  %v204 = vadd.f32 0.0, %v203
  %v205 = vpop.f32.mrf.mxu0
  %206 = vmatprep.mubr.f32.mxu0 0.0
  %207 = vmatmul.mubr.f32.gmra.mxu0 %v135
  %v208 = vpop.f32.mrf.mxu0
  %v209 = vadd.f32 0.0, %v208
  %v210 = vpop.f32.mrf.mxu0
  %211 = vdwg.mxu0
  %v212 = vmul.f32 %v204, %v34
  %v213 = vmul.f32 %v209, %v35
  %vm214 = vcmask 130048
  %v216 = vsel %vm214, 1.0, 0
  %218 = vmatprep.subr.mxu0 0.0
  %219 = vmatpush1.msra.mxu0 0.0
  %220 = vmatprep.subr.mxu0 0.0
  %221 = vmatpush1.msra.mxu0 0.0
  %222 = vmatprep.subr.mxu0 0.0
  %223 = vmatpush1.msra.mxu0 0.0
  %224 = vmatprep.subr.mxu0 0.0
  %225 = vmatpush1.msra.mxu0 0.0
  %226 = vmatprep.subr.mxu0 0.0
  %227 = vmatpush1.msra.mxu0 0.0
  %228 = vmatprep.subr.mxu0 0.0
  %229 = vmatpush1.msra.mxu0 0.0
  %230 = vmatprep.subr.mxu0 0.0
  %231 = vmatpush1.msra.mxu0 0.0
  %232 = vmatprep.subr.mxu0 0.0
  %233 = vmatpush1.msra.mxu0 0.0
  %234 = vmatprep.subr.mxu0 0.0
  %235 = vmatpush1.msra.mxu0 0.0
  %236 = vmatprep.subr.mxu0 0.0
  %237 = vmatpush1.msra.mxu0 0.0
  %238 = vmatprep.subr.mxu0 0.0
  %239 = vmatpush1.msra.mxu0 0.0
  %240 = vmatprep.subr.mxu0 0.0
  %241 = vmatpush1.msra.mxu0 0.0
  %242 = vmatprep.subr.mxu0 0.0
  %243 = vmatpush1.msra.mxu0 0.0
  %244 = vmatprep.subr.mxu0 0.0
  %245 = vmatpush1.msra.mxu0 0.0
  %246 = vmatprep.subr.mxu0 0.0
  %247 = vmatpush1.msra.mxu0 %v213
  %248 = vmatprep.subr.mxu0 0.0
  %249 = vmatpush1.msra.mxu0 %v212
  %250 = vmatprep.subr.mxu0 0.0
  %251 = vmatpush2.msra.mxu0 0.0
  %252 = vmatprep.subr.mxu0 0.0
  %253 = vmatpush2.msra.mxu0 0.0
  %254 = vmatprep.subr.mxu0 0.0
  %255 = vmatpush2.msra.mxu0 0.0
  %256 = vmatprep.subr.mxu0 0.0
  %257 = vmatpush2.msra.mxu0 0.0
  %258 = vmatprep.subr.mxu0 0.0
  %259 = vmatpush2.msra.mxu0 0.0
  %260 = vmatprep.subr.mxu0 0.0
  %261 = vmatpush2.msra.mxu0 0.0
  %262 = vmatprep.subr.mxu0 0.0
  %263 = vmatpush2.msra.mxu0 0.0
  %264 = vmatprep.subr.mxu0 0.0
  %265 = vmatpush2.msra.mxu0 0.0
  %266 = vmatprep.subr.mxu0 0.0
  %267 = vmatpush2.msra.mxu0 0.0
  %268 = vmatprep.subr.mxu0 0.0
  %269 = vmatpush2.msra.mxu0 0.0
  %270 = vmatprep.subr.mxu0 0.0
  %271 = vmatpush2.msra.mxu0 0.0
  %272 = vmatprep.subr.mxu0 0.0
  %273 = vmatpush2.msra.mxu0 0.0
  %274 = vmatprep.subr.mxu0 0.0
  %275 = vmatpush2.msra.mxu0 0.0
  %276 = vmatprep.subr.mxu0 0.0
  %277 = vmatpush2.msra.mxu0 0.0
  %278 = vmatprep.subr.mxu0 0.0
  %279 = vmatpush2.msra.mxu0 0.0
  %280 = vmatprep.subr.mxu0 0.0
  %281 = vmatpush2.msra.mxu0 0.0
  %282 = vmatprep.mubr.f32.mxu0 0.0
  %283 = vmatmul.mubr.f32.gmra.mxu0 %v216
  %v284 = vpop.f32.mrf.mxu0
  %v285 = vadd.f32 0.0, %v284
  %v286 = vpop.f32.mrf.mxu0
  %287 = vmatprep.mubr.f32.mxu0 0.0
  %288 = vmatmul.mubr.f32.gmra.mxu0 %v216
  %v289 = vpop.f32.mrf.mxu0
  %v290 = vadd.f32 0.0, %v289
  %v291 = vpop.f32.mrf.mxu0
  %292 = vdwg.mxu0
  %293 = vrot.lane.b32.xlu0 %v118, 64
  %v294 = vpop.permute.xlu0 %293
  %295 = vrot.lane.b32.xlu0 %v123, 64
  %v296 = vpop.permute.xlu0 %295
  %v297 = vsel %vm132, %v294, 0
  %v299 = vsel %vm132, %v296, 0
  %301 = vmatprep.subr.mxu0 0.0
  %302 = vmatpush1.msra.mxu0 0.0
  %303 = vmatprep.subr.mxu0 0.0
  %304 = vmatpush1.msra.mxu0 0.0
  %305 = vmatprep.subr.mxu0 0.0
  %306 = vmatpush1.msra.mxu0 0.0
  %307 = vmatprep.subr.mxu0 0.0
  %308 = vmatpush1.msra.mxu0 0.0
  %309 = vmatprep.subr.mxu0 0.0
  %310 = vmatpush1.msra.mxu0 0.0
  %311 = vmatprep.subr.mxu0 0.0
  %312 = vmatpush1.msra.mxu0 0.0
  %313 = vmatprep.subr.mxu0 0.0
  %314 = vmatpush1.msra.mxu0 0.0
  %315 = vmatprep.subr.mxu0 0.0
  %316 = vmatpush1.msra.mxu0 0.0
  %317 = vmatprep.subr.mxu0 0.0
  %318 = vmatpush1.msra.mxu0 0.0
  %319 = vmatprep.subr.mxu0 0.0
  %320 = vmatpush1.msra.mxu0 0.0
  %321 = vmatprep.subr.mxu0 0.0
  %322 = vmatpush1.msra.mxu0 0.0
  %323 = vmatprep.subr.mxu0 0.0
  %324 = vmatpush1.msra.mxu0 0.0
  %325 = vmatprep.subr.mxu0 0.0
  %326 = vmatpush1.msra.mxu0 0.0
  %327 = vmatprep.subr.mxu0 0.0
  %328 = vmatpush1.msra.mxu0 0.0
  %329 = vmatprep.subr.mxu0 0.0
  %330 = vmatpush1.msra.mxu0 0.0
  %331 = vmatprep.subr.mxu0 0.0
  %332 = vmatpush1.msra.mxu0 %v33
  %333 = vmatprep.subr.mxu0 0.0
  %334 = vmatpush2.msra.mxu0 0.0
  %335 = vmatprep.subr.mxu0 0.0
  %336 = vmatpush2.msra.mxu0 0.0
  %337 = vmatprep.subr.mxu0 0.0
  %338 = vmatpush2.msra.mxu0 0.0
  %339 = vmatprep.subr.mxu0 0.0
  %340 = vmatpush2.msra.mxu0 0.0
  %341 = vmatprep.subr.mxu0 0.0
  %342 = vmatpush2.msra.mxu0 0.0
  %343 = vmatprep.subr.mxu0 0.0
  %344 = vmatpush2.msra.mxu0 0.0
  %345 = vmatprep.subr.mxu0 0.0
  %346 = vmatpush2.msra.mxu0 0.0
  %347 = vmatprep.subr.mxu0 0.0
  %348 = vmatpush2.msra.mxu0 0.0
  %349 = vmatprep.subr.mxu0 0.0
  %350 = vmatpush2.msra.mxu0 0.0
  %351 = vmatprep.subr.mxu0 0.0
  %352 = vmatpush2.msra.mxu0 0.0
  %353 = vmatprep.subr.mxu0 0.0
  %354 = vmatpush2.msra.mxu0 0.0
  %355 = vmatprep.subr.mxu0 0.0
  %356 = vmatpush2.msra.mxu0 0.0
  %357 = vmatprep.subr.mxu0 0.0
  %358 = vmatpush2.msra.mxu0 0.0
  %359 = vmatprep.subr.mxu0 0.0
  %360 = vmatpush2.msra.mxu0 0.0
  %361 = vmatprep.subr.mxu0 0.0
  %362 = vmatpush2.msra.mxu0 0.0
  %363 = vmatprep.subr.mxu0 0.0
  %364 = vmatpush2.msra.mxu0 0.0
  %365 = vmatprep.mubr.f32.mxu0 0.0
  %366 = vmatmul.mubr.f32.gmra.mxu0 %v297
  %v367 = vpop.f32.mrf.mxu0
  %v368 = vadd.f32 %v285, %v367
  %v369 = vpop.f32.mrf.mxu0
  %370 = vmatprep.mubr.f32.mxu0 0.0
  %371 = vmatmul.mubr.f32.gmra.mxu0 %v299
  %v372 = vpop.f32.mrf.mxu0
  %v373 = vadd.f32 %v290, %v372
  %v374 = vpop.f32.mrf.mxu0
  %375 = vdwg.mxu0
  %vm376 = vcmp.gt.f32.partialorder %v368, 0.0
  %vm377 = vcmp.gt.f32.partialorder %v373, 0.0
  %v378 = vmul.f32 %v368, 0.2
  %v379 = vmul.f32 %v373, 0.2
  %v380 = vsel %vm376, %v368, %v378
  %v381 = vsel %vm377, %v373, %v379
  %v383 = vsel %vm214, %v31, 0
  %v386 = vsel %vm214, %v32, 0
  %388 = vmatprep.subr.mxu0 0.0
  %389 = vmatpush1.msra.mxu0 0.0
  %390 = vmatprep.subr.mxu0 0.0
  %391 = vmatpush1.msra.mxu0 0.0
  %392 = vmatprep.subr.mxu0 0.0
  %393 = vmatpush1.msra.mxu0 0.0
  %394 = vmatprep.subr.mxu0 0.0
  %395 = vmatpush1.msra.mxu0 0.0
  %396 = vmatprep.subr.mxu0 0.0
  %397 = vmatpush1.msra.mxu0 0.0
  %398 = vmatprep.subr.mxu0 0.0
  %399 = vmatpush1.msra.mxu0 0.0
  %400 = vmatprep.subr.mxu0 0.0
  %401 = vmatpush1.msra.mxu0 0.0
  %402 = vmatprep.subr.mxu0 0.0
  %403 = vmatpush1.msra.mxu0 0.0
  %404 = vmatprep.subr.mxu0 0.0
  %405 = vmatpush1.msra.mxu0 0.0
  %406 = vmatprep.subr.mxu0 0.0
  %407 = vmatpush1.msra.mxu0 0.0
  %408 = vmatprep.subr.mxu0 0.0
  %409 = vmatpush1.msra.mxu0 0.0
  %410 = vmatprep.subr.mxu0 0.0
  %411 = vmatpush1.msra.mxu0 0.0
  %412 = vmatprep.subr.mxu0 0.0
  %413 = vmatpush1.msra.mxu0 0.0
  %414 = vmatprep.subr.mxu0 0.0
  %415 = vmatpush1.msra.mxu0 0.0
  %416 = vmatprep.subr.mxu0 0.0
  %417 = vmatpush1.msra.mxu0 %v35
  %418 = vmatprep.subr.mxu0 0.0
  %419 = vmatpush1.msra.mxu0 %v34
  %420 = vmatprep.subr.mxu0 0.0
  %421 = vmatpush2.msra.mxu0 0.0
  %422 = vmatprep.subr.mxu0 0.0
  %423 = vmatpush2.msra.mxu0 0.0
  %424 = vmatprep.subr.mxu0 0.0
  %425 = vmatpush2.msra.mxu0 0.0
  %426 = vmatprep.subr.mxu0 0.0
  %427 = vmatpush2.msra.mxu0 0.0
  %428 = vmatprep.subr.mxu0 0.0
  %429 = vmatpush2.msra.mxu0 0.0
  %430 = vmatprep.subr.mxu0 0.0
  %431 = vmatpush2.msra.mxu0 0.0
  %432 = vmatprep.subr.mxu0 0.0
  %433 = vmatpush2.msra.mxu0 0.0
  %434 = vmatprep.subr.mxu0 0.0
  %435 = vmatpush2.msra.mxu0 0.0
  %436 = vmatprep.subr.mxu0 0.0
  %437 = vmatpush2.msra.mxu0 0.0
  %438 = vmatprep.subr.mxu0 0.0
  %439 = vmatpush2.msra.mxu0 0.0
  %440 = vmatprep.subr.mxu0 0.0
  %441 = vmatpush2.msra.mxu0 0.0
  %442 = vmatprep.subr.mxu0 0.0
  %443 = vmatpush2.msra.mxu0 0.0
  %444 = vmatprep.subr.mxu0 0.0
  %445 = vmatpush2.msra.mxu0 0.0
  %446 = vmatprep.subr.mxu0 0.0
  %447 = vmatpush2.msra.mxu0 0.0
  %448 = vmatprep.subr.mxu0 0.0
  %449 = vmatpush2.msra.mxu0 0.0
  %450 = vmatprep.subr.mxu0 0.0
  %451 = vmatpush2.msra.mxu0 0.0
  %452 = vmatprep.mubr.f32.mxu0 0.0
  %453 = vmatmul.mubr.f32.gmra.mxu0 %v383
  %v454 = vpop.f32.mrf.mxu0
  %v455 = vadd.f32 0.0, %v454
  %v456 = vpop.f32.mrf.mxu0
  %457 = vmatprep.mubr.f32.mxu0 0.0
  %458 = vmatmul.mubr.f32.gmra.mxu0 %v386
  %v459 = vpop.f32.mrf.mxu0
  %v460 = vadd.f32 0.0, %v459
  %v461 = vpop.f32.mrf.mxu0
  %462 = vdwg.mxu0
  %vm463 = vcmp.gt.f32.partialorder %v455, 0.0
  %vm464 = vcmp.gt.f32.partialorder %v460, 0.0
  %v465 = vsel %vm463, 0.0, -9e+15
  %v466 = vsel %vm464, 0.0, -9e+15
  %v467 = vmax.f32 %v380, -30.0
  %v468 = vmax.f32 %v381, -30.0
  %v469 = vmin.f32 %v467, 30.0
  %v470 = vmin.f32 %v468, 30.0
  %v471 = vadd.f32 %v469, %v465
  %v472 = vadd.f32 %v470, %v466
  %v473 = vmul.f32 %v471, 1.442695
  %v474 = vpow.pop %v473
  %v475 = vmul.f32 %v472, 1.442695
  %v476 = vpow.pop %v475
  %v477 = vsel %vm44, %v118, 1.0
  %v478 = vsel %vm44, %v123, 1.0
  %v479 = vld [vmem:[%s6] sm:$0xff]
  %v480 = vld [vmem:[%s6 + $0x8] sm:$0xff]
  %v481 = vld [vmem:[%s6 + $0x10] sm:$0xff]
  %v482 = vld [vmem:[%s6 + $0x18] sm:$0xff]
  %v483 = vld [vmem:[%s6 + $0x20] sm:$0xff]
  %v484 = vld [vmem:[%s6 + $0x28] sm:$0xff]
  %v485 = vld [vmem:[%s6 + $0x30] sm:$0xff]
  %v486 = vld [vmem:[%s6 + $0x38] sm:$0xff]
  %v487 = vld [vmem:[%s6 + $0x40] sm:$0xff]
  %v488 = vld [vmem:[%s6 + $0x48] sm:$0xff]
  %v489 = vld [vmem:[%s6 + $0x50] sm:$0xff]
  %v490 = vld [vmem:[%s6 + $0x58] sm:$0xff]
  %v491 = vld [vmem:[%s6 + $0x60] sm:$0xff]
  %v492 = vld [vmem:[%s6 + $0x68] sm:$0xff]
  %v493 = vld [vmem:[%s6 + $0x70] sm:$0xff]
  %v494 = vld [vmem:[%s6 + $0x78] sm:$0xff]
  %v495 = vmul.f32 %v477, %v479
  %v496 = vmul.f32 %v478, %v480
  %v497 = vmul.f32 %v477, %v481
  %v498 = vmul.f32 %v478, %v482
  %v499 = vmul.f32 %v477, %v483
  %v500 = vmul.f32 %v478, %v484
  %v501 = vmul.f32 %v477, %v485
  %v502 = vmul.f32 %v478, %v486
  %v503 = vmul.f32 %v477, %v487
  %v504 = vmul.f32 %v478, %v488
  %v505 = vmul.f32 %v477, %v489
  %v506 = vmul.f32 %v478, %v490
  %v507 = vmul.f32 %v477, %v491
  %v508 = vmul.f32 %v478, %v492
  %v509 = vmul.f32 %v477, %v493
  %v510 = vmul.f32 %v478, %v494
  %511 = vmatprep.subr.mxu0 0.0
  %512 = vmatpush1.msra.mxu0 %v510
  %513 = vmatprep.subr.mxu0 0.0
  %514 = vmatpush1.msra.mxu0 %v509
  %515 = vmatprep.subr.mxu0 0.0
  %516 = vmatpush1.msra.mxu0 %v508
  %517 = vmatprep.subr.mxu0 0.0
  %518 = vmatpush1.msra.mxu0 %v507
  %519 = vmatprep.subr.mxu0 0.0
  %520 = vmatpush1.msra.mxu0 %v506
  %521 = vmatprep.subr.mxu0 0.0
  %522 = vmatpush1.msra.mxu0 %v505
  %523 = vmatprep.subr.mxu0 0.0
  %524 = vmatpush1.msra.mxu0 %v504
  %525 = vmatprep.subr.mxu0 0.0
  %526 = vmatpush1.msra.mxu0 %v503
  %527 = vmatprep.subr.mxu0 0.0
  %528 = vmatpush1.msra.mxu0 %v502
  %529 = vmatprep.subr.mxu0 0.0
  %530 = vmatpush1.msra.mxu0 %v501
  %531 = vmatprep.subr.mxu0 0.0
  %532 = vmatpush1.msra.mxu0 %v500
  %533 = vmatprep.subr.mxu0 0.0
  %534 = vmatpush1.msra.mxu0 %v499
  %535 = vmatprep.subr.mxu0 0.0
  %536 = vmatpush1.msra.mxu0 %v498
  %537 = vmatprep.subr.mxu0 0.0
  %538 = vmatpush1.msra.mxu0 %v497
  %539 = vmatprep.subr.mxu0 0.0
  %540 = vmatpush1.msra.mxu0 %v496
  %541 = vmatprep.subr.mxu0 0.0
  %542 = vmatpush1.msra.mxu0 %v495
  %543 = vmatprep.subr.mxu0 0.0
  %544 = vmatpush2.msra.mxu0 0.0
  %545 = vmatprep.subr.mxu0 0.0
  %546 = vmatpush2.msra.mxu0 0.0
  %547 = vmatprep.subr.mxu0 0.0
  %548 = vmatpush2.msra.mxu0 0.0
  %549 = vmatprep.subr.mxu0 0.0
  %550 = vmatpush2.msra.mxu0 0.0
  %551 = vmatprep.subr.mxu0 0.0
  %552 = vmatpush2.msra.mxu0 0.0
  %553 = vmatprep.subr.mxu0 0.0
  %554 = vmatpush2.msra.mxu0 0.0
  %555 = vmatprep.subr.mxu0 0.0
  %556 = vmatpush2.msra.mxu0 0.0
  %557 = vmatprep.subr.mxu0 0.0
  %558 = vmatpush2.msra.mxu0 0.0
  %559 = vmatprep.subr.mxu0 0.0
  %560 = vmatpush2.msra.mxu0 0.0
  %561 = vmatprep.subr.mxu0 0.0
  %562 = vmatpush2.msra.mxu0 0.0
  %563 = vmatprep.subr.mxu0 0.0
  %564 = vmatpush2.msra.mxu0 0.0
  %565 = vmatprep.subr.mxu0 0.0
  %566 = vmatpush2.msra.mxu0 0.0
  %567 = vmatprep.subr.mxu0 0.0
  %568 = vmatpush2.msra.mxu0 0.0
  %569 = vmatprep.subr.mxu0 0.0
  %570 = vmatpush2.msra.mxu0 0.0
  %571 = vmatprep.subr.mxu0 0.0
  %572 = vmatpush2.msra.mxu0 0.0
  %573 = vmatprep.subr.mxu0 0.0
  %574 = vmatpush2.msra.mxu0 0.0
  %575 = vmatprep.mubr.f32.mxu0 0.0
  %576 = vmatmul.mubr.f32.gmra.mxu0 %v474
  %v577 = vpop.f32.mrf.mxu0
  %v578 = vadd.f32 0.0, %v577
  %v579 = vpop.f32.mrf.mxu0
  %580 = vmatprep.mubr.f32.mxu0 0.0
  %581 = vmatmul.mubr.f32.gmra.mxu0 %v476
  %v582 = vpop.f32.mrf.mxu0
  %v583 = vadd.f32 0.0, %v582
  %v584 = vpop.f32.mrf.mxu0
  %585 = vdwg.mxu0
  %v586 = vrcp.pop %v578
  %v587 = vrcp.pop %v583
  %v588 = vmul.f32 %v578, %v586
  %v589 = vmul.f32 %v583, %v587
  %v590 = vsub.f32 2.0, %v588
  %v591 = vsub.f32 2.0, %v589
  %v592 = vmul.f32 %v586, %v590
  %v593 = vmul.f32 %v587, %v591
  %v594 = vld [vmem:[%s7] sm:$0xff]
  %597 = vrot.lane.b32.xlu0 %v592, 64
  %v598 = vpop.permute.xlu0 %597
  %599 = vrot.lane.b32.xlu0 %v593, 64
  %v600 = vpop.permute.xlu0 %599
  %v601 = vsel %vm132, %v598, 0
  %v603 = vsel %vm132, %v600, 0
  %605 = vmatprep.subr.mxu0 0.0
  %606 = vmatpush1.msra.mxu0 0.0
  %607 = vmatprep.subr.mxu0 0.0
  %608 = vmatpush1.msra.mxu0 0.0
  %609 = vmatprep.subr.mxu0 0.0
  %610 = vmatpush1.msra.mxu0 0.0
  %611 = vmatprep.subr.mxu0 0.0
  %612 = vmatpush1.msra.mxu0 0.0
  %613 = vmatprep.subr.mxu0 0.0
  %614 = vmatpush1.msra.mxu0 0.0
  %615 = vmatprep.subr.mxu0 0.0
  %616 = vmatpush1.msra.mxu0 0.0
  %617 = vmatprep.subr.mxu0 0.0
  %618 = vmatpush1.msra.mxu0 0.0
  %619 = vmatprep.subr.mxu0 0.0
  %620 = vmatpush1.msra.mxu0 0.0
  %621 = vmatprep.subr.mxu0 0.0
  %622 = vmatpush1.msra.mxu0 0.0
  %623 = vmatprep.subr.mxu0 0.0
  %624 = vmatpush1.msra.mxu0 0.0
  %625 = vmatprep.subr.mxu0 0.0
  %626 = vmatpush1.msra.mxu0 0.0
  %627 = vmatprep.subr.mxu0 0.0
  %628 = vmatpush1.msra.mxu0 0.0
  %629 = vmatprep.subr.mxu0 0.0
  %630 = vmatpush1.msra.mxu0 0.0
  %631 = vmatprep.subr.mxu0 0.0
  %632 = vmatpush1.msra.mxu0 0.0
  %633 = vmatprep.subr.mxu0 0.0
  %634 = vmatpush1.msra.mxu0 0.0
  %635 = vmatprep.subr.mxu0 0.0
  %636 = vmatpush1.msra.mxu0 %v594
  %637 = vmatprep.subr.mxu0 0.0
  %638 = vmatpush2.msra.mxu0 0.0
  %639 = vmatprep.subr.mxu0 0.0
  %640 = vmatpush2.msra.mxu0 0.0
  %641 = vmatprep.subr.mxu0 0.0
  %642 = vmatpush2.msra.mxu0 0.0
  %643 = vmatprep.subr.mxu0 0.0
  %644 = vmatpush2.msra.mxu0 0.0
  %645 = vmatprep.subr.mxu0 0.0
  %646 = vmatpush2.msra.mxu0 0.0
  %647 = vmatprep.subr.mxu0 0.0
  %648 = vmatpush2.msra.mxu0 0.0
  %649 = vmatprep.subr.mxu0 0.0
  %650 = vmatpush2.msra.mxu0 0.0
  %651 = vmatprep.subr.mxu0 0.0
  %652 = vmatpush2.msra.mxu0 0.0
  %653 = vmatprep.subr.mxu0 0.0
  %654 = vmatpush2.msra.mxu0 0.0
  %655 = vmatprep.subr.mxu0 0.0
  %656 = vmatpush2.msra.mxu0 0.0
  %657 = vmatprep.subr.mxu0 0.0
  %658 = vmatpush2.msra.mxu0 0.0
  %659 = vmatprep.subr.mxu0 0.0
  %660 = vmatpush2.msra.mxu0 0.0
  %661 = vmatprep.subr.mxu0 0.0
  %662 = vmatpush2.msra.mxu0 0.0
  %663 = vmatprep.subr.mxu0 0.0
  %664 = vmatpush2.msra.mxu0 0.0
  %665 = vmatprep.subr.mxu0 0.0
  %666 = vmatpush2.msra.mxu0 0.0
  %667 = vmatprep.subr.mxu0 0.0
  %668 = vmatpush2.msra.mxu0 0.0
  %669 = vmatprep.mubr.f32.mxu0 0.0
  %670 = vmatmul.mubr.f32.gmra.mxu0 %v601
  %v671 = vpop.f32.mrf.mxu0
  %v672 = vadd.f32 0.0, %v671
  %v673 = vpop.f32.mrf.mxu0
  %674 = vmatprep.mubr.f32.mxu0 0.0
  %675 = vmatmul.mubr.f32.gmra.mxu0 %v603
  %v676 = vpop.f32.mrf.mxu0
  %v677 = vadd.f32 0.0, %v676
  %v678 = vpop.f32.mrf.mxu0
  %679 = vdwg.mxu0
  %v680 = vmul.f32 %v578, %v672
  %v681 = vmul.f32 %v583, %v677
  %vm682 = vcmp.gt.f32.partialorder %v680, 0.0
  %vm683 = vcmp.gt.f32.partialorder %v681, 0.0
  %v684 = vmin.f32 %v680, 0.0
  %v685 = vmin.f32 %v681, 0.0
  %v686 = vmul.f32 %v684, 1.442695
  %v687 = vpow.pop %v686
  %v688 = vmul.f32 %v685, 1.442695
  %v689 = vpow.pop %v688
  %v690 = vsub.f32 %v687, 1.0
  %v691 = vsub.f32 %v689, 1.0
  %v692 = vsel %vm682, %v680, %v690
  %v693 = vsel %vm683, %v681, %v691
  %v694 = vld [vmem:[%s3] sm:$0xff]
  %v695 = vld [vmem:[%s3 + $0x8] sm:$0xff]
  %v696 = vld [vmem:[%s3 + $0x10] sm:$0xff]
  %v697 = vld [vmem:[%s3 + $0x18] sm:$0xff]
  %v698 = vld [vmem:[%s3 + $0x20] sm:$0xff]
  %v699 = vld [vmem:[%s3 + $0x28] sm:$0xff]
  %v700 = vld [vmem:[%s3 + $0x30] sm:$0xff]
  %v701 = vld [vmem:[%s3 + $0x38] sm:$0xff]
  %v703 = vsel %vm44, %v692, 0
  %v706 = vsel %vm44, %v693, 0
  %708 = vmatprep.subr.mxu0 0.0
  %709 = vmatpush1.msra.mxu0 0.0
  %710 = vmatprep.subr.mxu0 0.0
  %711 = vmatpush1.msra.mxu0 0.0
  %712 = vmatprep.subr.mxu0 0.0
  %713 = vmatpush1.msra.mxu0 0.0
  %714 = vmatprep.subr.mxu0 0.0
  %715 = vmatpush1.msra.mxu0 0.0
  %716 = vmatprep.subr.mxu0 0.0
  %717 = vmatpush1.msra.mxu0 0.0
  %718 = vmatprep.subr.mxu0 0.0
  %719 = vmatpush1.msra.mxu0 0.0
  %720 = vmatprep.subr.mxu0 0.0
  %721 = vmatpush1.msra.mxu0 0.0
  %722 = vmatprep.subr.mxu0 0.0
  %723 = vmatpush1.msra.mxu0 0.0
  %724 = vmatprep.subr.mxu0 0.0
  %725 = vmatpush1.msra.mxu0 %v701
  %726 = vmatprep.subr.mxu0 0.0
  %727 = vmatpush1.msra.mxu0 %v700
  %728 = vmatprep.subr.mxu0 0.0
  %729 = vmatpush1.msra.mxu0 %v699
  %730 = vmatprep.subr.mxu0 0.0
  %731 = vmatpush1.msra.mxu0 %v698
  %732 = vmatprep.subr.mxu0 0.0
  %733 = vmatpush1.msra.mxu0 %v697
  %734 = vmatprep.subr.mxu0 0.0
  %735 = vmatpush1.msra.mxu0 %v696
  %736 = vmatprep.subr.mxu0 0.0
  %737 = vmatpush1.msra.mxu0 %v695
  %738 = vmatprep.subr.mxu0 0.0
  %739 = vmatpush1.msra.mxu0 %v694
  %740 = vmatprep.subr.mxu0 0.0
  %741 = vmatpush2.msra.mxu0 0.0
  %742 = vmatprep.subr.mxu0 0.0
  %743 = vmatpush2.msra.mxu0 0.0
  %744 = vmatprep.subr.mxu0 0.0
  %745 = vmatpush2.msra.mxu0 0.0
  %746 = vmatprep.subr.mxu0 0.0
  %747 = vmatpush2.msra.mxu0 0.0
  %748 = vmatprep.subr.mxu0 0.0
  %749 = vmatpush2.msra.mxu0 0.0
  %750 = vmatprep.subr.mxu0 0.0
  %751 = vmatpush2.msra.mxu0 0.0
  %752 = vmatprep.subr.mxu0 0.0
  %753 = vmatpush2.msra.mxu0 0.0
  %754 = vmatprep.subr.mxu0 0.0
  %755 = vmatpush2.msra.mxu0 0.0
  %756 = vmatprep.subr.mxu0 0.0
  %757 = vmatpush2.msra.mxu0 0.0
  %758 = vmatprep.subr.mxu0 0.0
  %759 = vmatpush2.msra.mxu0 0.0
  %760 = vmatprep.subr.mxu0 0.0
  %761 = vmatpush2.msra.mxu0 0.0
  %762 = vmatprep.subr.mxu0 0.0
  %763 = vmatpush2.msra.mxu0 0.0
  %764 = vmatprep.subr.mxu0 0.0
  %765 = vmatpush2.msra.mxu0 0.0
  %766 = vmatprep.subr.mxu0 0.0
  %767 = vmatpush2.msra.mxu0 0.0
  %768 = vmatprep.subr.mxu0 0.0
  %769 = vmatpush2.msra.mxu0 0.0
  %770 = vmatprep.subr.mxu0 0.0
  %771 = vmatpush2.msra.mxu0 0.0
  %772 = vmatprep.mubr.f32.mxu0 0.0
  %773 = vmatmul.mubr.f32.gmra.mxu0 %v703
  %v774 = vpop.f32.mrf.mxu0
  %v775 = vadd.f32 0.0, %v774
  %v776 = vpop.f32.mrf.mxu0
  %777 = vmatprep.mubr.f32.mxu0 0.0
  %778 = vmatmul.mubr.f32.gmra.mxu0 %v706
  %v779 = vpop.f32.mrf.mxu0
  %v780 = vadd.f32 0.0, %v779
  %v781 = vpop.f32.mrf.mxu0
  %782 = vdwg.mxu0
  %784 = vset.pattern.permute.xlu0 8
  %785 = vperm.xlu0 %784, %v775
  %v786 = vpop.permute.xlu0 %785
  %789 = vset.pattern.permute.xlu0 8
  %790 = vperm.xlu0 %789, %v780
  %v791 = vpop.permute.xlu0 %790
  %v793 = vmul.f32 %v786, %v34
  %v794 = vmul.f32 %v791, %v35
  %795 = vmatprep.subr.mxu0 0.0
  %796 = vmatpush1.msra.mxu0 0.0
  %797 = vmatprep.subr.mxu0 0.0
  %798 = vmatpush1.msra.mxu0 0.0
  %799 = vmatprep.subr.mxu0 0.0
  %800 = vmatpush1.msra.mxu0 0.0
  %801 = vmatprep.subr.mxu0 0.0
  %802 = vmatpush1.msra.mxu0 0.0
  %803 = vmatprep.subr.mxu0 0.0
  %804 = vmatpush1.msra.mxu0 0.0
  %805 = vmatprep.subr.mxu0 0.0
  %806 = vmatpush1.msra.mxu0 0.0
  %807 = vmatprep.subr.mxu0 0.0
  %808 = vmatpush1.msra.mxu0 0.0
  %809 = vmatprep.subr.mxu0 0.0
  %810 = vmatpush1.msra.mxu0 0.0
  %811 = vmatprep.subr.mxu0 0.0
  %812 = vmatpush1.msra.mxu0 0.0
  %813 = vmatprep.subr.mxu0 0.0
  %814 = vmatpush1.msra.mxu0 0.0
  %815 = vmatprep.subr.mxu0 0.0
  %816 = vmatpush1.msra.mxu0 0.0
  %817 = vmatprep.subr.mxu0 0.0
  %818 = vmatpush1.msra.mxu0 0.0
  %819 = vmatprep.subr.mxu0 0.0
  %820 = vmatpush1.msra.mxu0 0.0
  %821 = vmatprep.subr.mxu0 0.0
  %822 = vmatpush1.msra.mxu0 0.0
  %823 = vmatprep.subr.mxu0 0.0
  %824 = vmatpush1.msra.mxu0 %v794
  %825 = vmatprep.subr.mxu0 0.0
  %826 = vmatpush1.msra.mxu0 %v793
  %827 = vmatprep.subr.mxu0 0.0
  %828 = vmatpush2.msra.mxu0 0.0
  %829 = vmatprep.subr.mxu0 0.0
  %830 = vmatpush2.msra.mxu0 0.0
  %831 = vmatprep.subr.mxu0 0.0
  %832 = vmatpush2.msra.mxu0 0.0
  %833 = vmatprep.subr.mxu0 0.0
  %834 = vmatpush2.msra.mxu0 0.0
  %835 = vmatprep.subr.mxu0 0.0
  %836 = vmatpush2.msra.mxu0 0.0
  %837 = vmatprep.subr.mxu0 0.0
  %838 = vmatpush2.msra.mxu0 0.0
  %839 = vmatprep.subr.mxu0 0.0
  %840 = vmatpush2.msra.mxu0 0.0
  %841 = vmatprep.subr.mxu0 0.0
  %842 = vmatpush2.msra.mxu0 0.0
  %843 = vmatprep.subr.mxu0 0.0
  %844 = vmatpush2.msra.mxu0 0.0
  %845 = vmatprep.subr.mxu0 0.0
  %846 = vmatpush2.msra.mxu0 0.0
  %847 = vmatprep.subr.mxu0 0.0
  %848 = vmatpush2.msra.mxu0 0.0
  %849 = vmatprep.subr.mxu0 0.0
  %850 = vmatpush2.msra.mxu0 0.0
  %851 = vmatprep.subr.mxu0 0.0
  %852 = vmatpush2.msra.mxu0 0.0
  %853 = vmatprep.subr.mxu0 0.0
  %854 = vmatpush2.msra.mxu0 0.0
  %855 = vmatprep.subr.mxu0 0.0
  %856 = vmatpush2.msra.mxu0 0.0
  %857 = vmatprep.subr.mxu0 0.0
  %858 = vmatpush2.msra.mxu0 0.0
  %859 = vmatprep.mubr.f32.mxu0 0.0
  %860 = vmatmul.mubr.f32.gmra.mxu0 %v216
  %v861 = vpop.f32.mrf.mxu0
  %v862 = vadd.f32 0.0, %v861
  %v863 = vpop.f32.mrf.mxu0
  %864 = vmatprep.mubr.f32.mxu0 0.0
  %865 = vmatmul.mubr.f32.gmra.mxu0 %v216
  %v866 = vpop.f32.mrf.mxu0
  %v867 = vadd.f32 0.0, %v866
  %v868 = vpop.f32.mrf.mxu0
  %869 = vdwg.mxu0
  %870 = vset.pattern.permute.xlu0 7
  %871 = vperm.xlu0 %870, %v775
  %v872 = vpop.permute.xlu0 %871
  %874 = vset.pattern.permute.xlu0 7
  %875 = vperm.xlu0 %874, %v780
  %v876 = vpop.permute.xlu0 %875
  %v878 = vadd.f32 %v872, %v862
  %v879 = vadd.f32 %v876, %v867
  %vm880 = vcmp.gt.f32.partialorder %v878, 0.0
  %vm881 = vcmp.gt.f32.partialorder %v879, 0.0
  %v882 = vmul.f32 %v878, 0.2
  %v883 = vmul.f32 %v879, 0.2
  %v884 = vsel %vm880, %v878, %v882
  %v885 = vsel %vm881, %v879, %v883
  %vm886 = vcmp.gt.f32.partialorder %v31, 0.0
  %vm887 = vcmp.gt.f32.partialorder %v32, 0.0
  %v888 = vsel %vm886, 0.0, -9e+15
  %v889 = vsel %vm887, 0.0, -9e+15
  %v890 = vmax.f32 %v884, -30.0
  %v891 = vmax.f32 %v885, -30.0
  %v892 = vmin.f32 %v890, 30.0
  %v893 = vmin.f32 %v891, 30.0
  %v894 = vadd.f32 %v892, %v888
  %v895 = vadd.f32 %v893, %v889
  %v896 = vmul.f32 %v894, 1.442695
  %v897 = vpow.pop %v896
  %v898 = vmul.f32 %v895, 1.442695
  %v899 = vpow.pop %v898
  %vm900 = vcmask 56320
  %v901 = vsel %vm900, %v775, 1.0
  %v902 = vsel %vm900, %v780, 1.0
  %v904 = vsel %vm214, %v897, 0
  %v907 = vsel %vm214, %v899, 0
  %909 = vmatprep.subr.mxu0 0.0
  %910 = vmatpush1.msra.mxu0 0.0
  %911 = vmatprep.subr.mxu0 0.0
  %912 = vmatpush1.msra.mxu0 0.0
  %913 = vmatprep.subr.mxu0 0.0
  %914 = vmatpush1.msra.mxu0 0.0
  %915 = vmatprep.subr.mxu0 0.0
  %916 = vmatpush1.msra.mxu0 0.0
  %917 = vmatprep.subr.mxu0 0.0
  %918 = vmatpush1.msra.mxu0 0.0
  %919 = vmatprep.subr.mxu0 0.0
  %920 = vmatpush1.msra.mxu0 0.0
  %921 = vmatprep.subr.mxu0 0.0
  %922 = vmatpush1.msra.mxu0 0.0
  %923 = vmatprep.subr.mxu0 0.0
  %924 = vmatpush1.msra.mxu0 0.0
  %925 = vmatprep.subr.mxu0 0.0
  %926 = vmatpush1.msra.mxu0 0.0
  %927 = vmatprep.subr.mxu0 0.0
  %928 = vmatpush1.msra.mxu0 0.0
  %929 = vmatprep.subr.mxu0 0.0
  %930 = vmatpush1.msra.mxu0 0.0
  %931 = vmatprep.subr.mxu0 0.0
  %932 = vmatpush1.msra.mxu0 0.0
  %933 = vmatprep.subr.mxu0 0.0
  %934 = vmatpush1.msra.mxu0 0.0
  %935 = vmatprep.subr.mxu0 0.0
  %936 = vmatpush1.msra.mxu0 0.0
  %937 = vmatprep.subr.mxu0 0.0
  %938 = vmatpush1.msra.mxu0 %v902
  %939 = vmatprep.subr.mxu0 0.0
  %940 = vmatpush1.msra.mxu0 %v901
  %941 = vmatprep.subr.mxu0 0.0
  %942 = vmatpush2.msra.mxu0 0.0
  %943 = vmatprep.subr.mxu0 0.0
  %944 = vmatpush2.msra.mxu0 0.0
  %945 = vmatprep.subr.mxu0 0.0
  %946 = vmatpush2.msra.mxu0 0.0
  %947 = vmatprep.subr.mxu0 0.0
  %948 = vmatpush2.msra.mxu0 0.0
  %949 = vmatprep.subr.mxu0 0.0
  %950 = vmatpush2.msra.mxu0 0.0
  %951 = vmatprep.subr.mxu0 0.0
  %952 = vmatpush2.msra.mxu0 0.0
  %953 = vmatprep.subr.mxu0 0.0
  %954 = vmatpush2.msra.mxu0 0.0
  %955 = vmatprep.subr.mxu0 0.0
  %956 = vmatpush2.msra.mxu0 0.0
  %957 = vmatprep.subr.mxu0 0.0
  %958 = vmatpush2.msra.mxu0 0.0
  %959 = vmatprep.subr.mxu0 0.0
  %960 = vmatpush2.msra.mxu0 0.0
  %961 = vmatprep.subr.mxu0 0.0
  %962 = vmatpush2.msra.mxu0 0.0
  %963 = vmatprep.subr.mxu0 0.0
  %964 = vmatpush2.msra.mxu0 0.0
  %965 = vmatprep.subr.mxu0 0.0
  %966 = vmatpush2.msra.mxu0 0.0
  %967 = vmatprep.subr.mxu0 0.0
  %968 = vmatpush2.msra.mxu0 0.0
  %969 = vmatprep.subr.mxu0 0.0
  %970 = vmatpush2.msra.mxu0 0.0
  %971 = vmatprep.subr.mxu0 0.0
  %972 = vmatpush2.msra.mxu0 0.0
  %973 = vmatprep.mubr.f32.mxu0 0.0
  %974 = vmatmul.mubr.f32.gmra.mxu0 %v904
  %v975 = vpop.f32.mrf.mxu0
  %v976 = vadd.f32 0.0, %v975
  %v977 = vpop.f32.mrf.mxu0
  %978 = vmatprep.mubr.f32.mxu0 0.0
  %979 = vmatmul.mubr.f32.gmra.mxu0 %v907
  %v980 = vpop.f32.mrf.mxu0
  %v981 = vadd.f32 0.0, %v980
  %v982 = vpop.f32.mrf.mxu0
  %983 = vdwg.mxu0
  %v984 = vrcp.pop %v976
  %v985 = vrcp.pop %v981
  %v986 = vmul.f32 %v976, %v984
  %v987 = vmul.f32 %v981, %v985
  %v988 = vsub.f32 2.0, %v986
  %v989 = vsub.f32 2.0, %v987
  %v990 = vmul.f32 %v984, %v988
  %v991 = vmul.f32 %v985, %v989
  %993 = vset.pattern.permute.xlu0 7
  %994 = vperm.xlu0 %993, %v990
  %v995 = vpop.permute.xlu0 %994
  %998 = vset.pattern.permute.xlu0 7
  %999 = vperm.xlu0 %998, %v991
  %v1000 = vpop.permute.xlu0 %999
  %v1002 = vmul.f32 %v976, %v995
  %v1003 = vmul.f32 %v981, %v1000
  %vm1004 = vcmp.gt.f32.partialorder %v1002, 0.0
  %vm1005 = vcmp.gt.f32.partialorder %v1003, 0.0
  %v1006 = vmin.f32 %v1002, 0.0
  %v1007 = vmin.f32 %v1003, 0.0
  %v1008 = vmul.f32 %v1006, 1.442695
  %v1009 = vpow.pop %v1008
  %v1010 = vmul.f32 %v1007, 1.442695
  %v1011 = vpow.pop %v1010
  %v1012 = vsub.f32 %v1009, 1.0
  %v1013 = vsub.f32 %v1011, 1.0
  %v1014 = vsel %vm1004, %v1002, %v1012
  %v1015 = vsel %vm1005, %v1003, %v1013
  %v1016 = vsel %vm900, %v1014, -inf
  %1017 = vmax.xlane.f32.xlu0 %v1016
  %v1018 = vpop.xlane.xlu0 %1017
  %v1019 = vsel %vm900, %v1015, -inf
  %1020 = vmax.xlane.f32.xlu0 %v1019
  %v1021 = vpop.xlane.xlu0 %1020
  %v1022 = vsub.f32 %v1014, %v1018
  %v1023 = vsub.f32 %v1015, %v1021
  %v1024 = vmul.f32 %v1022, 1.442695
  %v1025 = vpow.pop %v1024
  %v1026 = vmul.f32 %v1023, 1.442695
  %v1027 = vpow.pop %v1026
  %v1028 = vsel %vm900, %v1025, 0.0
  %1029 = vadd.xlane.f32.xlu0 %v1028
  %v1030 = vpop.xlane.xlu0 %1029
  %v1031 = vsel %vm900, %v1027, 0.0
  %1032 = vadd.xlane.f32.xlu0 %v1031
  %v1033 = vpop.xlane.xlu0 %1032
  %v1034 = vlog2.pop %v1030
  %v1035 = vmul.f32 %v1034, 0.6931472
  %v1036 = vlog2.pop %v1033
  %v1037 = vmul.f32 %v1036, 0.6931472
  %v1038 = vsub.f32 %v1022, %v1035
  %v1039 = vsub.f32 %v1023, %v1037
  %1040 = vst.msk [vmem:[%s8] sm:$0xff] %vm900, %v1038
  %1041 = vst.msk [vmem:[%s8 + $0x8] sm:$0xff] %vm900, %v1039
  // Predicated region
  $region34: #{gat_forward.1} parent=0 // pred_check
    _
  $region35: #{gat_forward.1} parent=0 // pred_check_branch
    %1043 = sbr.rel (0) target = $region37
  $region36: #{gat_forward.1} parent=0 // pred_region
    _
  $region37: #{gat_forward.1} parent=0 // pred_fallthru
    _
  // Predicated region
  $region38: #{gat_forward.1} parent=0 // pred_check
    _
  $region39: #{gat_forward.1} parent=0 // pred_check_branch
    %1045 = sbr.rel (0) target = $region41
  $region40: #{gat_forward.1} parent=0 // pred_region
    _
  $region41: #{gat_forward.1} parent=0 // pred_fallthru
    _

</llo_original>
